<compile_context>
chip_gen: v7x
topology: tpu7x:2x2x1
jax: 0.10.0
libtpu: 0.0.40
codegen_flags: <defaults>
</compile_context>

<pallas_src>
import jax
import jax.numpy as jnp
from jax.experimental import pallas as pl
from jax.experimental.pallas import tpu as pltpu

_LANE = 128
_DEF_TILE_N = 512
_DEF_TILE_K = 2048
_VMEM_BUDGET = 36 * 1024 * 1024   # target double-buffered working set (v7x-safe)
_VMEM_LIMIT = 64 * 1024 * 1024    # scoped VMEM limit handed to the compiler


def _round_up(x, m):
    return (x + m - 1) // m * m


def _plan(n_dst, n_src, f_in, f_out, tile_n, tile_k, compute_dtype, out_dtype):
    """Shared tile/padding plan so the adjacency can be preprocessed once per graph."""
    fuse_proj = f_in <= f_out                       # (A@X)@W  vs  A@(X@W)
    f_in_pad = _round_up(f_in, _LANE)
    f_out_pad = _round_up(f_out, _LANE)
    feat_cols = f_in_pad if fuse_proj else f_out_pad

    n_dst_128 = _round_up(n_dst, _LANE)
    n_src_128 = _round_up(n_src, _LANE)
    tile_n = _round_up(min(tile_n, n_dst_128), _LANE)
    tile_k = _round_up(min(tile_k, n_src_128), _LANE)
    # v7x megacore: give the "parallel" dst axis >= 2 blocks when the graph is
    # large enough so both TensorCores get work (no effect on v5e/v6e).
    if n_dst_128 >= 2 * _LANE and n_dst_128 // tile_n < 2:
        tile_n = _round_up(n_dst_128 // 2, _LANE)

    cbytes = jnp.dtype(compute_dtype).itemsize
    obytes = jnp.dtype(out_dtype).itemsize

    def working_set(tn, tk):
        s = 2 * tn * tk * cbytes                    # adjacency, double-buffered
        s += 2 * tk * feat_cols * cbytes            # X / XW, double-buffered
        s += 2 * tn * f_out_pad * obytes            # output block(s)
        s += tn * feat_cols * 4                     # f32 accumulator
        s += f_in_pad * f_out_pad * cbytes          # grid-invariant W (fused path)
        return s

    while tile_k > _LANE and working_set(tile_n, tile_k) > _VMEM_BUDGET:
        tile_k = _round_up(tile_k // 2, _LANE)
    while tile_n > _LANE and working_set(tile_n, tile_k) > _VMEM_BUDGET:
        tile_n = _round_up(tile_n // 2, _LANE)

    return dict(fuse_proj=fuse_proj, tile_n=tile_n, tile_k=tile_k,
                n_dst_pad=_round_up(n_dst, tile_n),
                n_src_pad=_round_up(n_src, tile_k),
                f_in_pad=f_in_pad, f_out_pad=f_out_pad)


def prepare_adjacency(adj, f_in, f_out, *, tile_n=_DEF_TILE_N, tile_k=_DEF_TILE_K,
                      compute_dtype=jnp.bfloat16, out_dtype=jnp.float32):
    """Cast/pad the dense adjacency ONCE per graph (hoisted out of per-layer calls).

    0/1 adjacency is exact in bf16, so the cast is lossless.
    """
    n_dst, n_src = adj.shape
    p = _plan(n_dst, n_src, f_in, f_out, tile_n, tile_k, compute_dtype, out_dtype)
    if adj.shape == (p["n_dst_pad"], p["n_src_pad"]) and adj.dtype == compute_dtype:
        return adj
    adj_p = jnp.zeros((p["n_dst_pad"], p["n_src_pad"]), compute_dtype)
    return adj_p.at[:n_dst, :n_src].set(adj.astype(compute_dtype))


# ----------------------------- kernels --------------------------------------

def _agg_proj_kernel(adj_ref, x_ref, w_ref, b_ref, o_ref, acc_ref):
    """out_tile = (A_tile @ X) @ W + b, K-tiled over source nodes (f_in <= f_out)."""
    k = pl.program_id(1)

    @pl.when(k == 0)
    def _():
        acc_ref[...] = jnp.zeros_like(acc_ref)

    # Aggregate in the (lane-dense, padded) f_in space; bf16 operands, f32 acc.
    acc_ref[...] += jnp.dot(adj_ref[...], x_ref[...],
                            preferred_element_type=jnp.float32)

    @pl.when(k == pl.num_programs(1) - 1)
    def _():
        # bf16 x bf16 projection on the MXU (f32 accumulation), then bias.
        proj = jnp.dot(acc_ref[...].astype(w_ref.dtype), w_ref[...],
                       preferred_element_type=jnp.float32)
        o_ref[...] = (proj + b_ref[...]).astype(o_ref.dtype)


def _agg_kernel_acc(adj_ref, xw_ref, b_ref, o_ref, acc_ref):
    """out_tile = A_tile @ XW + b, f32 scratch accumulator (non-f32 outputs)."""
    k = pl.program_id(1)

    @pl.when(k == 0)
    def _():
        acc_ref[...] = jnp.zeros_like(acc_ref)

    acc_ref[...] += jnp.dot(adj_ref[...], xw_ref[...],
                            preferred_element_type=jnp.float32)

    @pl.when(k == pl.num_programs(1) - 1)
    def _():
        o_ref[...] = (acc_ref[...] + b_ref[...]).astype(o_ref.dtype)


def _agg_kernel_direct(adj_ref, xw_ref, b_ref, o_ref):
    """out_tile = A_tile @ XW + b, accumulating directly into the f32 output block
    (its block index is constant along k, so it stays VMEM-resident)."""
    k = pl.program_id(1)

    @pl.when(k == 0)
    def _():
        o_ref[...] = jnp.zeros_like(o_ref)

    o_ref[...] += jnp.dot(adj_ref[...], xw_ref[...],
                          preferred_element_type=jnp.float32)

    @pl.when(k == pl.num_programs(1) - 1)
    def _():
        o_ref[...] = o_ref[...] + b_ref[...]


# ----------------------------- wrapper ---------------------------------------

def gcn_conv(adj, x, w, b, *, n_dst=None, tile_n=_DEF_TILE_N, tile_k=_DEF_TILE_K,
             compute_dtype=jnp.bfloat16, return_padded=False):
    """DGL GraphConv(norm='none', weight=True, bias=True): out = A @ X @ W + b.

    `adj` may be the raw [n_dst, n_src] 0/1 adjacency (any dtype) or an
    already-preprocessed padded bf16 adjacency from `prepare_adjacency`
    (zero-copy in that case). `n_dst` is the true number of destination nodes
    when a padded adjacency is passed.
    """
    f_in, f_out = w.shape
    n_src = x.shape[0]
    if n_dst is None:
        n_dst = adj.shape[0]
    out_dtype = x.dtype

    p = _plan(n_dst, n_src, f_in, f_out, tile_n, tile_k, compute_dtype, out_dtype)
    tile_n, tile_k = p["tile_n"], p["tile_k"]
    n_dst_pad, n_src_pad = p["n_dst_pad"], p["n_src_pad"]
    f_in_pad, f_out_pad = p["f_in_pad"], p["f_out_pad"]
    fuse_proj = p["fuse_proj"]

    # Adjacency: reuse a preprocessed padded/cast array with zero extra HBM traffic.
    if adj.shape == (n_dst_pad, n_src_pad) and adj.dtype == compute_dtype:
        adj_p = adj
    else:
        adj_p = jnp.zeros((n_dst_pad, n_src_pad), compute_dtype)
        adj_p = adj_p.at[:n_dst, :n_src].set(
            adj[:n_dst, :n_src].astype(compute_dtype))  # 0/1 exact in bf16

    b_p = jnp.zeros((1, f_out_pad), jnp.float32).at[0, :f_out].set(
        b.astype(jnp.float32))

    grid = (n_dst_pad // tile_n, n_src_pad // tile_k)
    out_bytes = n_dst_pad * f_out_pad * jnp.dtype(out_dtype).itemsize
    adj_bytes = adj_p.size * adj_p.dtype.itemsize

    if fuse_proj:
        # (A @ X) @ W : pad f_in to 128 so the accumulator / A@X matmul are lane-dense.
        x_p = jnp.zeros((n_src_pad, f_in_pad), compute_dtype)
        x_p = x_p.at[:n_src, :f_in].set(x.astype(compute_dtype))
        w_p = jnp.zeros((f_in_pad, f_out_pad), compute_dtype)   # bf16 W (fast MXU path)
        w_p = w_p.at[:f_in, :f_out].set(w.astype(compute_dtype))
        kernel = _agg_proj_kernel
        in_specs = [
            pl.BlockSpec((tile_n, tile_k), lambda i, k: (i, k)),      # adjacency tile
            pl.BlockSpec((tile_k, f_in_pad), lambda i, k: (k, 0)),    # X tile
            pl.BlockSpec((f_in_pad, f_out_pad), lambda i, k: (0, 0)),  # W (invariant)
            pl.BlockSpec((1, f_out_pad), lambda i, k: (0, 0)),        # bias (invariant)
        ]
        operands = (adj_p, x_p, w_p, b_p)
        scratch = [pltpu.VMEM((tile_n, f_in_pad), jnp.float32)]
        flops = (2 * n_dst_pad * n_src_pad * f_in_pad
                 + 2 * n_dst_pad * f_in_pad * f_out_pad)
        bytes_accessed = (adj_bytes + x_p.size * x_p.dtype.itemsize
                          + w_p.size * w_p.dtype.itemsize + b_p.size * 4 + out_bytes)
    else:
        # Hoist the projection out of the tiled sweep: XW computed once.
        xw = jnp.dot(x.astype(jnp.float32), w.astype(jnp.float32),
                     preferred_element_type=jnp.float32)
        xw_p = jnp.zeros((n_src_pad, f_out_pad), compute_dtype)
        xw_p = xw_p.at[:n_src, :f_out].set(xw.astype(compute_dtype))
        direct = (out_dtype == jnp.float32)
        kernel = _agg_kernel_direct if direct else _agg_kernel_acc
        in_specs = [
            pl.BlockSpec((tile_n, tile_k), lambda i, k: (i, k)),      # adjacency tile
            pl.BlockSpec((tile_k, f_out_pad), lambda i, k: (k, 0)),   # XW tile
            pl.BlockSpec((1, f_out_pad), lambda i, k: (0, 0)),        # bias (invariant)
        ]
        operands = (adj_p, xw_p, b_p)
        scratch = [] if direct else [pltpu.VMEM((tile_n, f_out_pad), jnp.float32)]
        flops = 2 * n_dst_pad * n_src_pad * f_out_pad
        bytes_accessed = (adj_bytes + xw_p.size * xw_p.dtype.itemsize
                          + b_p.size * 4 + out_bytes)

    out_pad = pl.pallas_call(
        kernel,
        out_shape=jax.ShapeDtypeStruct((n_dst_pad, f_out_pad), out_dtype),
        grid_spec=pltpu.PrefetchScalarGridSpec(
            num_scalar_prefetch=0,
            grid=grid,
            in_specs=in_specs,
            out_specs=pl.BlockSpec((tile_n, f_out_pad), lambda i, k: (i, 0)),
            scratch_shapes=scratch,
        ),
        compiler_params=pltpu.CompilerParams(
            dimension_semantics=("parallel", "arbitrary"),
            vmem_limit_bytes=_VMEM_LIMIT,
        ),
        cost_estimate=pl.CostEstimate(
            flops=flops, transcendentals=0, bytes_accessed=bytes_accessed),
    )(*operands)

    if return_padded:
        return out_pad                      # keep padded through a multi-layer GCN
    return out_pad[:n_dst, :f_out]


if __name__ == "__main__":
    # Small shapes consistent with the module: N nodes, input_size -> output_size.
    N = 128          # number of graph nodes
    F_IN = 32        # input_size
    F_OUT = 64       # output_size

    key = jax.random.PRNGKey(0)
    k_adj, k_x, k_w = jax.random.split(key, 3)

    # Random sparse-ish graph as dense adjacency (A[dst, src] = 1 iff edge src->dst).
    adj = (jax.random.uniform(k_adj, (N, N)) < 0.1).astype(jnp.float32)
    x = jax.random.normal(k_x, (N, F_IN), dtype=jnp.float32)

    # DGL GraphConv-style params: xavier_uniform weight, zero bias.
    limit = (6.0 / (F_IN + F_OUT)) ** 0.5
    w = jax.random.uniform(k_w, (F_IN, F_OUT), minval=-limit, maxval=limit,
                           dtype=jnp.float32)
    b = jnp.zeros((F_OUT,), dtype=jnp.float32)

    # Path A: f_in <= f_out -> fused (A@X)@W + b, with adjacency preprocessed once.
    adj_pre = prepare_adjacency(adj, F_IN, F_OUT)
    out = gcn_conv(adj_pre, x, w, b, n_dst=N)
    out = jax.block_until_ready(out)
    ref = adj @ x @ w + b[None, :]
    assert out.shape == (N, F_OUT)
    assert jnp.allclose(out, ref, atol=5e-2, rtol=2e-2), "mismatch vs reference (path A)"

    # Same call on the raw (unprepared) adjacency must agree too.
    out_raw = jax.block_until_ready(gcn_conv(adj, x, w, b))
    assert jnp.allclose(out_raw, out, atol=1e-6), "prepared vs raw adjacency mismatch"

    # Path B: f_in > f_out -> hoisted XW, direct-output A@XW sweep.
    w2 = jax.random.uniform(k_w, (F_OUT, F_IN), minval=-limit, maxval=limit,
                            dtype=jnp.float32)
    b2 = jnp.full((F_IN,), 0.1, dtype=jnp.float32)
    x2 = jax.random.normal(k_x, (N, F_OUT), dtype=jnp.float32)
    out2 = jax.block_until_ready(gcn_conv(adj, x2, w2, b2))
    ref2 = adj @ x2 @ w2 + b2[None, :]
    assert out2.shape == (N, F_IN)
    assert jnp.allclose(out2, ref2, atol=5e-2, rtol=2e-2), "mismatch vs reference (path B)"

    print("KERNEL_OK")
</pallas_src>

<mosaic_0001>
module attributes {stable_mosaic.version = 11 : i64} {
  func.func @_agg_proj_kernel(%arg0: i32, %arg1: i32, %arg2: memref<128x128xbf16, #tpu.memory_space<vmem>>, %arg3: memref<128x128xbf16, #tpu.memory_space<vmem>>, %arg4: memref<128x128xbf16, #tpu.memory_space<vmem>>, %arg5: memref<1x128xf32, #tpu.memory_space<vmem>>, %arg6: memref<128x128xf32, #tpu.memory_space<vmem>>, %arg7: memref<128x128xf32, #tpu.memory_space<vmem>>) attributes {dimension_semantics = [#tpu.dimension_semantics<parallel>, #tpu.dimension_semantics<arbitrary>], iteration_bounds = array<i64: 1, 1>, scalar_prefetch = 0 : i64, scratch_operands = 1 : i64, tpu.core_type = #tpu.core_type<tc>, window_params = [{transform_indices = @transform_0, window_bounds = array<i64: 128, 128>}, {transform_indices = @transform_1, window_bounds = array<i64: 128, 128>}, {pipeline_mode = #tpu.pipeline_mode<synchronous>, transform_indices = @transform_2, window_bounds = array<i64: 128, 128>}, {pipeline_mode = #tpu.pipeline_mode<synchronous>, transform_indices = @transform_3, window_bounds = array<i64: 1, 128>}, {transform_indices = @transform_4, window_bounds = array<i64: 128, 128>}]} {
    %c0_i32 = arith.constant 0 : i32
    %0 = arith.cmpi eq, %arg1, %c0_i32 : i32
    %1 = arith.extui %0 : i1 to i32
    %c0_i32_0 = arith.constant 0 : i32
    %2 = arith.cmpi ne, %1, %c0_i32_0 : i32
    scf.if %2 {
      %cst_10 = arith.constant 0.000000e+00 : f32
      %12 = vector.broadcast %cst_10 : f32 to vector<128x128xf32>
      %c0_11 = arith.constant 0 : index
      %c0_12 = arith.constant 0 : index
      %13 = vector.load %arg7[%c0_11, %c0_12] : memref<128x128xf32, #tpu.memory_space<vmem>>, vector<128x128xf32>
      tpu.vector_store %arg7[%c0_11, %c0_12], %12 {strides = array<i32>} : memref<128x128xf32, #tpu.memory_space<vmem>>, vector<128x128xf32>,
    } else {
    }
    %c0 = arith.constant 0 : index
    %c0_1 = arith.constant 0 : index
    %3 = vector.load %arg7[%c0, %c0_1] : memref<128x128xf32, #tpu.memory_space<vmem>>, vector<128x128xf32>
    %c0_2 = arith.constant 0 : index
    %c0_3 = arith.constant 0 : index
    %4 = vector.load %arg2[%c0_2, %c0_3] : memref<128x128xbf16, #tpu.memory_space<vmem>>, vector<128x128xbf16>
    %c0_4 = arith.constant 0 : index
    %c0_5 = arith.constant 0 : index
    %5 = vector.load %arg3[%c0_4, %c0_5] : memref<128x128xbf16, #tpu.memory_space<vmem>>, vector<128x128xbf16>
    %cst = arith.constant dense<0.000000e+00> : vector<128x128xf32>
    %6 = tpu.matmul %4, %5, %cst {dimension_numbers = #tpu.dot_dimension_numbers<[1], [0], [0], [1], [0, 0, 1, 1], [], []>} : vector<128x128xbf16>, vector<128x128xbf16>, vector<128x128xf32> -> vector<128x128xf32>
    %7 = arith.addf %3, %6 : vector<128x128xf32>
    %c0_6 = arith.constant 0 : index
    %c0_7 = arith.constant 0 : index
    %8 = vector.load %arg7[%c0_6, %c0_7] : memref<128x128xf32, #tpu.memory_space<vmem>>, vector<128x128xf32>
    tpu.vector_store %arg7[%c0_6, %c0_7], %7 {strides = array<i32>} : memref<128x128xf32, #tpu.memory_space<vmem>>, vector<128x128xf32>,
    %c0_i32_8 = arith.constant 0 : i32
    %9 = arith.cmpi eq, %arg1, %c0_i32_8 : i32
    %10 = arith.extui %9 : i1 to i32
    %c0_i32_9 = arith.constant 0 : i32
    %11 = arith.cmpi ne, %10, %c0_i32_9 : i32
    scf.if %11 {
      %c0_10 = arith.constant 0 : index
      %c0_11 = arith.constant 0 : index
      %12 = vector.load %arg7[%c0_10, %c0_11] : memref<128x128xf32, #tpu.memory_space<vmem>>, vector<128x128xf32>
      %13 = arith.truncf %12 : vector<128x128xf32> to vector<128x128xbf16>
      %c0_12 = arith.constant 0 : index
      %c0_13 = arith.constant 0 : index
      %14 = vector.load %arg4[%c0_12, %c0_13] : memref<128x128xbf16, #tpu.memory_space<vmem>>, vector<128x128xbf16>
      %cst_14 = arith.constant dense<0.000000e+00> : vector<128x128xf32>
      %15 = tpu.matmul %13, %14, %cst_14 {dimension_numbers = #tpu.dot_dimension_numbers<[1], [0], [0], [1], [0, 0, 1, 1], [], []>} : vector<128x128xbf16>, vector<128x128xbf16>, vector<128x128xf32> -> vector<128x128xf32>
      %c0_15 = arith.constant 0 : index
      %c0_16 = arith.constant 0 : index
      %16 = vector.load %arg5[%c0_15, %c0_16] : memref<1x128xf32, #tpu.memory_space<vmem>>, vector<1x128xf32>
      %17 = vector.broadcast %16 : vector<1x128xf32> to vector<128x128xf32>
      %18 = arith.addf %15, %17 : vector<128x128xf32>
      %c0_17 = arith.constant 0 : index
      %c0_18 = arith.constant 0 : index
      %19 = vector.load %arg6[%c0_17, %c0_18] : memref<128x128xf32, #tpu.memory_space<vmem>>, vector<128x128xf32>
      tpu.vector_store %arg6[%c0_17, %c0_18], %18 {strides = array<i32>} : memref<128x128xf32, #tpu.memory_space<vmem>>, vector<128x128xf32>,
    } else {
    }
    return
  }
  func.func @transform_0(%arg0: i32, %arg1: i32) -> (i32, i32) {
    %c0_i32 = arith.constant 0 : i32
    return %arg0, %arg1 : i32, i32
  }
  func.func @transform_1(%arg0: i32, %arg1: i32) -> (i32, i32) {
    %c0_i32 = arith.constant 0 : i32
    %c0_i32_0 = arith.constant 0 : i32
    return %arg1, %c0_i32 : i32, i32
  }
  func.func @transform_2(%arg0: i32, %arg1: i32) -> (i32, i32) {
    %c0_i32 = arith.constant 0 : i32
    %c0_i32_0 = arith.constant 0 : i32
    %c0_i32_1 = arith.constant 0 : i32
    return %c0_i32, %c0_i32_0 : i32, i32
  }
  func.func @transform_3(%arg0: i32, %arg1: i32) -> (i32, i32) {
    %c0_i32 = arith.constant 0 : i32
    %c0_i32_0 = arith.constant 0 : i32
    %c0_i32_1 = arith.constant 0 : i32
    return %c0_i32, %c0_i32_0 : i32, i32
  }
  func.func @transform_4(%arg0: i32, %arg1: i32) -> (i32, i32) {
    %c0_i32 = arith.constant 0 : i32
    %c0_i32_0 = arith.constant 0 : i32
    return %arg0, %c0_i32 : i32, i32
  }
}

</mosaic_0001>

<llo_original>
// kernel: tpu_custom_call.1
$region0: #{tpu_custom_call.1}
  #allocation0 [shape = 'u32[]', space=smem, size = 0x4, offset = 0x4, fixed_abs, tag = 'smem constant byte address 0x4 - core index']
  #allocation1 [shape = 'u32[144,128]{1,0:T(1,128)}', space=vmem, size = 0x12000, scoped, tag = 'internal scratch']
  #allocation2 [shape = 'f32[128,128]{1,0:T(8,128)}', space=vmem, size = 0x10000, scoped, tag = 'scratch operand']
  %s0 = inlined_call_operand.hbm [shape: bf16[128,128], index: 0, kind: input, shape index: {}]
  %s1 = inlined_call_operand.hbm [shape: bf16[128,128], index: 1, kind: input, shape index: {}]
  %s2 = inlined_call_operand.hbm [shape: bf16[128,128], index: 2, kind: input, shape index: {}]
  %s3 = inlined_call_operand.hbm [shape: f32[1,128], index: 3, kind: input, shape index: {}]
  %s4 = inlined_call_operand.hbm [shape: f32[128,128], index: 4, kind: output, shape index: {}]
  %s5 = sld [smem:[#allocation0]]
  $region50: #{tpu_custom_call.1} parent=0
    _
  %s7 = ssub.s32 1, %s5
  %s8 = scalar_select 0, %s7, %s5
  $region1: #{tpu_custom_call.1} parent=0
    #allocation3 [shape = 'u8[32768]{0}', space=vmem, size = 0x8000, scoped, tag = 'input window, operand 0, single buffered']
    #allocation4 [shape = 's32[1]{0}', space=sflag, size = 0x4, scoped, tag = 'scoped memory for tpu_custom_call.1']
    #allocation5 [shape = 's32[1]{0}', space=sflag, size = 0x4, scoped, tag = 'scoped memory for tpu_custom_call.1']
    #allocation6 [shape = 'u8[32768]{0}', space=vmem, size = 0x8000, scoped, tag = 'input window, operand 1, single buffered']
    #allocation7 [shape = 's32[1]{0}', space=sflag, size = 0x4, scoped, tag = 'scoped memory for tpu_custom_call.1']
    #allocation8 [shape = 'u8[32768]{0}', space=vmem, size = 0x8000, scoped, tag = 'input window, operand 2, single buffered']
    #allocation9 [shape = 'u8[512]{0}', space=vmem, size = 0x400, scoped, tag = 'input window, operand 3, single buffered']
    #allocation10 [shape = 's32[1]{0}', space=sflag, size = 0x4, scoped, tag = 'scoped memory for tpu_custom_call.1']
    #allocation11 [shape = 'u8[65536]{0}', space=vmem, size = 0x10000, scoped, tag = 'output window, operand 0, single buffered']
    %9 = vsyncpa [#allocation4], 0
    %10 = vsyncpa [#allocation7], 0
    %11 = vsyncpa [#allocation10], 0
    %12 = vsyncpa [#allocation5], 0
    // Predicated region
    $region2: #{tpu_custom_call.1} parent=1 // pred_check
      _
    $region3: #{tpu_custom_call.1} parent=1 // pred_check_branch
      %14 = sbr.rel (0) target = $region5
    $region4: #{tpu_custom_call.1} parent=1 // pred_region
      %s16 = ssub.s32 1024, 1024
      %17 = vsyncadd [#allocation4], %s16
      %s18 = sshll.u32 [#allocation3], 4
      %s19 = int_to_ptr.vmem [resolvable:$true] %s18
      %24 = dma.hbm_to_vmem [thread:$0]  %s0, 1024, %s19, [#allocation4], 64, 64, 4
    $region5: #{tpu_custom_call.1} parent=1 // pred_fallthru
      _
    // Predicated region
    $region6: #{tpu_custom_call.1} parent=1 // pred_check
      _
    $region7: #{tpu_custom_call.1} parent=1 // pred_check_branch
      %26 = sbr.rel (0) target = $region9
    $region8: #{tpu_custom_call.1} parent=1 // pred_region
      %s28 = ssub.s32 1024, 1024
      %29 = vsyncadd [#allocation7], %s28
      %s30 = sshll.u32 [#allocation6], 4
      %s31 = int_to_ptr.vmem [resolvable:$true] %s30
      %36 = dma.hbm_to_vmem [thread:$0]  %s1, 1024, %s31, [#allocation7], 64, 64, 4
    $region9: #{tpu_custom_call.1} parent=1 // pred_fallthru
      _
    // Predicated region
    $region10: #{tpu_custom_call.1} parent=1 // pred_check
      _
    $region11: #{tpu_custom_call.1} parent=1 // pred_check_branch
      %38 = sbr.rel (0) target = $region13
    $region12: #{tpu_custom_call.1} parent=1 // pred_region
      %s40 = ssub.s32 1024, 1024
      %41 = vsyncadd [#allocation7], %s40
      %s42 = sshll.u32 [#allocation8], 4
      %s43 = int_to_ptr.vmem [resolvable:$true] %s42
      %48 = dma.hbm_to_vmem [thread:$0]  %s2, 1024, %s43, [#allocation7], 64, 64, 4
    $region13: #{tpu_custom_call.1} parent=1 // pred_fallthru
      _
    // Predicated region
    $region14: #{tpu_custom_call.1} parent=1 // pred_check
      _
    $region15: #{tpu_custom_call.1} parent=1 // pred_check_branch
      %50 = sbr.rel (0) target = $region17
    $region16: #{tpu_custom_call.1} parent=1 // pred_region
      %s52 = ssub.s32 16, 16
      %53 = vsyncadd [#allocation10], %s52
      %s55 = sshll.u32 [#allocation9], 4
      %s56 = int_to_ptr.vmem [resolvable:$true] %s55
      %58 = dma.hbm_to_vmem [thread:$0]  %s3, 16, %s56, [#allocation10]
    $region17: #{tpu_custom_call.1} parent=1 // pred_fallthru
      _
    // Predicated region
    $region18: #{tpu_custom_call.1} parent=1 // pred_check
      _
    $region19: #{tpu_custom_call.1} parent=1 // pred_check_branch
      %60 = sbr.rel (0) target = $region21
    $region20: #{tpu_custom_call.1} parent=1 // pred_region
      %61 = dma.done [#allocation4], 1024
    $region21: #{tpu_custom_call.1} parent=1 // pred_fallthru
      _
    // Predicated region
    $region22: #{tpu_custom_call.1} parent=1 // pred_check
      _
    $region23: #{tpu_custom_call.1} parent=1 // pred_check_branch
      %63 = sbr.rel (0) target = $region25
    $region24: #{tpu_custom_call.1} parent=1 // pred_region
      %64 = dma.done [#allocation7], 1024
    $region25: #{tpu_custom_call.1} parent=1 // pred_fallthru
      _
    // Predicated region
    $region26: #{tpu_custom_call.1} parent=1 // pred_check
      _
    $region27: #{tpu_custom_call.1} parent=1 // pred_check_branch
      %66 = sbr.rel (0) target = $region29
    $region28: #{tpu_custom_call.1} parent=1 // pred_region
      %67 = dma.done [#allocation7], 1024
    $region29: #{tpu_custom_call.1} parent=1 // pred_fallthru
      _
    // Predicated region
    $region30: #{tpu_custom_call.1} parent=1 // pred_check
      _
    $region31: #{tpu_custom_call.1} parent=1 // pred_check_branch
      %69 = sbr.rel (0) target = $region33
    $region32: #{tpu_custom_call.1} parent=1 // pred_region
      %70 = dma.done [#allocation10], 16
    $region33: #{tpu_custom_call.1} parent=1 // pred_fallthru
      _
    %p72 = scmp.eq.s32.totalorder 0, 0
    // Predicated region
    $region34: #{tpu_custom_call.1} parent=1 // pred_check
      %p73 = pneg %p72
    $region35: #{tpu_custom_call.1} parent=1 // pred_check_branch
      %75 = sbr.rel (%p73) target = $region37
    $region36: #{tpu_custom_call.1} parent=1 // pred_region
      %76 = vst [vmem:[#allocation2] sm:$0xff] 0.0
      %77 = vst [vmem:[#allocation2 + $0x8] sm:$0xff] 0.0
      %78 = vst [vmem:[#allocation2 + $0x10] sm:$0xff] 0.0
      %79 = vst [vmem:[#allocation2 + $0x18] sm:$0xff] 0.0
      %80 = vst [vmem:[#allocation2 + $0x20] sm:$0xff] 0.0
      %81 = vst [vmem:[#allocation2 + $0x28] sm:$0xff] 0.0
      %82 = vst [vmem:[#allocation2 + $0x30] sm:$0xff] 0.0
      %83 = vst [vmem:[#allocation2 + $0x38] sm:$0xff] 0.0
      %84 = vst [vmem:[#allocation2 + $0x40] sm:$0xff] 0.0
      %85 = vst [vmem:[#allocation2 + $0x48] sm:$0xff] 0.0
      %86 = vst [vmem:[#allocation2 + $0x50] sm:$0xff] 0.0
      %87 = vst [vmem:[#allocation2 + $0x58] sm:$0xff] 0.0
      %88 = vst [vmem:[#allocation2 + $0x60] sm:$0xff] 0.0
      %89 = vst [vmem:[#allocation2 + $0x68] sm:$0xff] 0.0
      %90 = vst [vmem:[#allocation2 + $0x70] sm:$0xff] 0.0
      %91 = vst [vmem:[#allocation2 + $0x78] sm:$0xff] 0.0
    $region37: #{tpu_custom_call.1} parent=1 // pred_fallthru
      _
    %v92 = vld [vmem:[#allocation2] sm:$0xff]
    %v93 = vld [vmem:[#allocation2 + $0x8] sm:$0xff]
    %v94 = vld [vmem:[#allocation2 + $0x10] sm:$0xff]
    %v95 = vld [vmem:[#allocation2 + $0x18] sm:$0xff]
    %v96 = vld [vmem:[#allocation2 + $0x20] sm:$0xff]
    %v97 = vld [vmem:[#allocation2 + $0x28] sm:$0xff]
    %v98 = vld [vmem:[#allocation2 + $0x30] sm:$0xff]
    %v99 = vld [vmem:[#allocation2 + $0x38] sm:$0xff]
    %v100 = vld [vmem:[#allocation2 + $0x40] sm:$0xff]
    %v101 = vld [vmem:[#allocation2 + $0x48] sm:$0xff]
    %v102 = vld [vmem:[#allocation2 + $0x50] sm:$0xff]
    %v103 = vld [vmem:[#allocation2 + $0x58] sm:$0xff]
    %v104 = vld [vmem:[#allocation2 + $0x60] sm:$0xff]
    %v105 = vld [vmem:[#allocation2 + $0x68] sm:$0xff]
    %v106 = vld [vmem:[#allocation2 + $0x70] sm:$0xff]
    %v107 = vld [vmem:[#allocation2 + $0x78] sm:$0xff]
    %v108 = vld [vmem:[#allocation3] sm:$0xf]
    %v109 = vld [vmem:[#allocation3 + $0x4] sm:$0xf]
    %v110 = vld [vmem:[#allocation3 + $0x8] sm:$0xf]
    %v111 = vld [vmem:[#allocation3 + $0xc] sm:$0xf]
    %v112 = vld [vmem:[#allocation3 + $0x10] sm:$0xf]
    %v113 = vld [vmem:[#allocation3 + $0x14] sm:$0xf]
    %v114 = vld [vmem:[#allocation3 + $0x18] sm:$0xf]
    %v115 = vld [vmem:[#allocation3 + $0x1c] sm:$0xf]
    %v116 = vld [vmem:[#allocation3 + $0x20] sm:$0xf]
    %v117 = vld [vmem:[#allocation3 + $0x24] sm:$0xf]
    %v118 = vld [vmem:[#allocation3 + $0x28] sm:$0xf]
    %v119 = vld [vmem:[#allocation3 + $0x2c] sm:$0xf]
    %v120 = vld [vmem:[#allocation3 + $0x30] sm:$0xf]
    %v121 = vld [vmem:[#allocation3 + $0x34] sm:$0xf]
    %v122 = vld [vmem:[#allocation3 + $0x38] sm:$0xf]
    %v123 = vld [vmem:[#allocation3 + $0x3c] sm:$0xf]
    %v124 = vld [vmem:[#allocation6] sm:$0xf]
    %v125 = vld [vmem:[#allocation6 + $0x4] sm:$0xf]
    %v126 = vld [vmem:[#allocation6 + $0x8] sm:$0xf]
    %v127 = vld [vmem:[#allocation6 + $0xc] sm:$0xf]
    %v128 = vld [vmem:[#allocation6 + $0x10] sm:$0xf]
    %v129 = vld [vmem:[#allocation6 + $0x14] sm:$0xf]
    %v130 = vld [vmem:[#allocation6 + $0x18] sm:$0xf]
    %v131 = vld [vmem:[#allocation6 + $0x1c] sm:$0xf]
    %v132 = vld [vmem:[#allocation6 + $0x20] sm:$0xf]
    %v133 = vld [vmem:[#allocation6 + $0x24] sm:$0xf]
    %v134 = vld [vmem:[#allocation6 + $0x28] sm:$0xf]
    %v135 = vld [vmem:[#allocation6 + $0x2c] sm:$0xf]
    %v136 = vld [vmem:[#allocation6 + $0x30] sm:$0xf]
    %v137 = vld [vmem:[#allocation6 + $0x34] sm:$0xf]
    %v138 = vld [vmem:[#allocation6 + $0x38] sm:$0xf]
    %v139 = vld [vmem:[#allocation6 + $0x3c] sm:$0xf]
    %v156 = vunpack.c.l.b16 %v108
    %v157 = vunpack.c.l.b16 %v109
    %v158 = vunpack.c.l.b16 %v110
    %v159 = vunpack.c.l.b16 %v111
    %v160 = vunpack.c.l.b16 %v112
    %v161 = vunpack.c.l.b16 %v113
    %v162 = vunpack.c.l.b16 %v114
    %v163 = vunpack.c.l.b16 %v115
    %v164 = vunpack.c.l.b16 %v116
    %v165 = vunpack.c.l.b16 %v117
    %v166 = vunpack.c.l.b16 %v118
    %v167 = vunpack.c.l.b16 %v119
    %v168 = vunpack.c.l.b16 %v120
    %v169 = vunpack.c.l.b16 %v121
    %v170 = vunpack.c.l.b16 %v122
    %v171 = vunpack.c.l.b16 %v123
    %v172 = vpack.c.b16 %v157, %v156
    %v173 = vpack.c.b16 %v159, %v158
    %v174 = vpack.c.b16 %v161, %v160
    %v175 = vpack.c.b16 %v163, %v162
    %v176 = vpack.c.b16 %v165, %v164
    %v177 = vpack.c.b16 %v167, %v166
    %v178 = vpack.c.b16 %v169, %v168
    %v179 = vpack.c.b16 %v171, %v170
    %v204 = vunpack.c.l.b16 %v124
    %v205 = vunpack.c.l.b16 %v125
    %v206 = vunpack.c.l.b16 %v126
    %v207 = vunpack.c.l.b16 %v127
    %v208 = vunpack.c.l.b16 %v128
    %v209 = vunpack.c.l.b16 %v129
    %v210 = vunpack.c.l.b16 %v130
    %v211 = vunpack.c.l.b16 %v131
    %v212 = vunpack.c.l.b16 %v132
    %v213 = vunpack.c.l.b16 %v133
    %v214 = vunpack.c.l.b16 %v134
    %v215 = vunpack.c.l.b16 %v135
    %v216 = vunpack.c.l.b16 %v136
    %v217 = vunpack.c.l.b16 %v137
    %v218 = vunpack.c.l.b16 %v138
    %v219 = vunpack.c.l.b16 %v139
    %v220 = vpack.c.b16 %v205, %v204
    %v221 = vpack.c.b16 %v207, %v206
    %v222 = vpack.c.b16 %v209, %v208
    %v223 = vpack.c.b16 %v211, %v210
    %v224 = vpack.c.b16 %v213, %v212
    %v225 = vpack.c.b16 %v215, %v214
    %v226 = vpack.c.b16 %v217, %v216
    %v227 = vpack.c.b16 %v219, %v218
    %236 = vmatprep.subr.bf16.mxu0 0
    %237 = vmatpush1.bf16.msra.mxu0 %v220
    %238 = vmatprep.subr.bf16.mxu0 0
    %239 = vmatpush1.bf16.msra.mxu0 %v221
    %240 = vmatprep.subr.bf16.mxu0 0
    %241 = vmatpush1.bf16.msra.mxu0 %v222
    %242 = vmatprep.subr.bf16.mxu0 0
    %243 = vmatpush1.bf16.msra.mxu0 %v223
    %244 = vmatprep.subr.bf16.mxu0 0
    %245 = vmatpush1.bf16.msra.mxu0 %v224
    %246 = vmatprep.subr.bf16.mxu0 0
    %247 = vmatpush1.bf16.msra.mxu0 %v225
    %248 = vmatprep.subr.bf16.mxu0 0
    %249 = vmatpush1.bf16.msra.mxu0 %v226
    %250 = vmatprep.subr.bf16.mxu0 0
    %251 = vmatpush1.bf16.msra.mxu0 %v227
    %252 = vmatprep.subr.bf16.mxu0 0
    %253 = vmatpush1.bf16.msra.mxu0 0
    %254 = vmatprep.subr.bf16.mxu0 0
    %255 = vmatpush1.bf16.msra.mxu0 0
    %256 = vmatprep.subr.bf16.mxu0 0
    %257 = vmatpush1.bf16.msra.mxu0 0
    %258 = vmatprep.subr.bf16.mxu0 0
    %259 = vmatpush1.bf16.msra.mxu0 0
    %260 = vmatprep.subr.bf16.mxu0 0
    %261 = vmatpush1.bf16.msra.mxu0 0
    %262 = vmatprep.subr.bf16.mxu0 0
    %263 = vmatpush1.bf16.msra.mxu0 0
    %264 = vmatprep.subr.bf16.mxu0 0
    %265 = vmatpush1.bf16.msra.mxu0 0
    %266 = vmatprep.subr.bf16.mxu0 0
    %267 = vmatpush1.bf16.msra.mxu0 0
    %268 = vmatprep.mubr.bf16.mxu0 0
    %269 = vmatmul.mubr.bf16.gmra.mrb[0].mxu0 %v172
    %v270 = vpop.f32.mrb[0].mxu0
    %v271 = vadd.f32 0.0, %v270
    %v272 = vpop.f32.mrb[0].mxu0
    %v273 = vpop.f32.mrb[0].mxu0
    %v274 = vadd.f32 0.0, %v273
    %v275 = vpop.f32.mrb[0].mxu0
    %276 = vmatprep.mubr.bf16.mxu0 0
    %277 = vmatmul.mubr.bf16.gmra.mrb[0].mxu0 %v173
    %v278 = vpop.f32.mrb[0].mxu0
    %v279 = vadd.f32 0.0, %v278
    %v280 = vpop.f32.mrb[0].mxu0
    %v281 = vpop.f32.mrb[0].mxu0
    %v282 = vadd.f32 0.0, %v281
    %v283 = vpop.f32.mrb[0].mxu0
    %284 = vmatprep.mubr.bf16.mxu0 0
    %285 = vmatmul.mubr.bf16.gmra.mrb[0].mxu0 %v174
    %v286 = vpop.f32.mrb[0].mxu0
    %v287 = vadd.f32 0.0, %v286
    %v288 = vpop.f32.mrb[0].mxu0
    %v289 = vpop.f32.mrb[0].mxu0
    %v290 = vadd.f32 0.0, %v289
    %v291 = vpop.f32.mrb[0].mxu0
    %292 = vmatprep.mubr.bf16.mxu0 0
    %293 = vmatmul.mubr.bf16.gmra.mrb[0].mxu0 %v175
    %v294 = vpop.f32.mrb[0].mxu0
    %v295 = vadd.f32 0.0, %v294
    %v296 = vpop.f32.mrb[0].mxu0
    %v297 = vpop.f32.mrb[0].mxu0
    %v298 = vadd.f32 0.0, %v297
    %v299 = vpop.f32.mrb[0].mxu0
    %300 = vmatprep.mubr.bf16.mxu0 0
    %301 = vmatmul.mubr.bf16.gmra.mrb[0].mxu0 %v176
    %v302 = vpop.f32.mrb[0].mxu0
    %v303 = vadd.f32 0.0, %v302
    %v304 = vpop.f32.mrb[0].mxu0
    %v305 = vpop.f32.mrb[0].mxu0
    %v306 = vadd.f32 0.0, %v305
    %v307 = vpop.f32.mrb[0].mxu0
    %308 = vmatprep.mubr.bf16.mxu0 0
    %309 = vmatmul.mubr.bf16.gmra.mrb[0].mxu0 %v177
    %v310 = vpop.f32.mrb[0].mxu0
    %v311 = vadd.f32 0.0, %v310
    %v312 = vpop.f32.mrb[0].mxu0
    %v313 = vpop.f32.mrb[0].mxu0
    %v314 = vadd.f32 0.0, %v313
    %v315 = vpop.f32.mrb[0].mxu0
    %316 = vmatprep.mubr.bf16.mxu0 0
    %317 = vmatmul.mubr.bf16.gmra.mrb[0].mxu0 %v178
    %v318 = vpop.f32.mrb[0].mxu0
    %v319 = vadd.f32 0.0, %v318
    %v320 = vpop.f32.mrb[0].mxu0
    %v321 = vpop.f32.mrb[0].mxu0
    %v322 = vadd.f32 0.0, %v321
    %v323 = vpop.f32.mrb[0].mxu0
    %324 = vmatprep.mubr.bf16.mxu0 0
    %325 = vmatmul.mubr.bf16.gmra.mrb[0].mxu0 %v179
    %v326 = vpop.f32.mrb[0].mxu0
    %v327 = vadd.f32 0.0, %v326
    %v328 = vpop.f32.mrb[0].mxu0
    %v329 = vpop.f32.mrb[0].mxu0
    %v330 = vadd.f32 0.0, %v329
    %v331 = vpop.f32.mrb[0].mxu0
    %332 = vdwg.mxu0
    %v333 = vadd.f32 %v92, %v271
    %v334 = vadd.f32 %v93, %v274
    %v335 = vadd.f32 %v94, %v279
    %v336 = vadd.f32 %v95, %v282
    %v337 = vadd.f32 %v96, %v287
    %v338 = vadd.f32 %v97, %v290
    %v339 = vadd.f32 %v98, %v295
    %v340 = vadd.f32 %v99, %v298
    %v341 = vadd.f32 %v100, %v303
    %v342 = vadd.f32 %v101, %v306
    %v343 = vadd.f32 %v102, %v311
    %v344 = vadd.f32 %v103, %v314
    %v345 = vadd.f32 %v104, %v319
    %v346 = vadd.f32 %v105, %v322
    %v347 = vadd.f32 %v106, %v327
    %v348 = vadd.f32 %v107, %v330
    %349 = vst [vmem:[#allocation2] sm:$0xff] %v333
    %350 = vst [vmem:[#allocation2 + $0x8] sm:$0xff] %v334
    %351 = vst [vmem:[#allocation2 + $0x10] sm:$0xff] %v335
    %352 = vst [vmem:[#allocation2 + $0x18] sm:$0xff] %v336
    %353 = vst [vmem:[#allocation2 + $0x20] sm:$0xff] %v337
    %354 = vst [vmem:[#allocation2 + $0x28] sm:$0xff] %v338
    %355 = vst [vmem:[#allocation2 + $0x30] sm:$0xff] %v339
    %356 = vst [vmem:[#allocation2 + $0x38] sm:$0xff] %v340
    %357 = vst [vmem:[#allocation2 + $0x40] sm:$0xff] %v341
    %358 = vst [vmem:[#allocation2 + $0x48] sm:$0xff] %v342
    %359 = vst [vmem:[#allocation2 + $0x50] sm:$0xff] %v343
    %360 = vst [vmem:[#allocation2 + $0x58] sm:$0xff] %v344
    %361 = vst [vmem:[#allocation2 + $0x60] sm:$0xff] %v345
    %362 = vst [vmem:[#allocation2 + $0x68] sm:$0xff] %v346
    %363 = vst [vmem:[#allocation2 + $0x70] sm:$0xff] %v347
    %364 = vst [vmem:[#allocation2 + $0x78] sm:$0xff] %v348
    // Predicated region
    $region38: #{tpu_custom_call.1} parent=1 // pred_check
      %p365 = pneg %p72
    $region39: #{tpu_custom_call.1} parent=1 // pred_check_branch
      %367 = sbr.rel (%p365) target = $region41
    $region40: #{tpu_custom_call.1} parent=1 // pred_region
      %v368 = vld [vmem:[#allocation2] sm:$0xff]
      %v369 = vld [vmem:[#allocation2 + $0x8] sm:$0xff]
      %v370 = vld [vmem:[#allocation2 + $0x10] sm:$0xff]
      %v371 = vld [vmem:[#allocation2 + $0x18] sm:$0xff]
      %v372 = vld [vmem:[#allocation2 + $0x20] sm:$0xff]
      %v373 = vld [vmem:[#allocation2 + $0x28] sm:$0xff]
      %v374 = vld [vmem:[#allocation2 + $0x30] sm:$0xff]
      %v375 = vld [vmem:[#allocation2 + $0x38] sm:$0xff]
      %v376 = vld [vmem:[#allocation2 + $0x40] sm:$0xff]
      %v377 = vld [vmem:[#allocation2 + $0x48] sm:$0xff]
      %v378 = vld [vmem:[#allocation2 + $0x50] sm:$0xff]
      %v379 = vld [vmem:[#allocation2 + $0x58] sm:$0xff]
      %v380 = vld [vmem:[#allocation2 + $0x60] sm:$0xff]
      %v381 = vld [vmem:[#allocation2 + $0x68] sm:$0xff]
      %v382 = vld [vmem:[#allocation2 + $0x70] sm:$0xff]
      %v383 = vld [vmem:[#allocation2 + $0x78] sm:$0xff]
      %v384 = vpack.c.bf16 %v369, %v368
      %v385 = vpack.c.bf16 %v371, %v370
      %v386 = vpack.c.bf16 %v373, %v372
      %v387 = vpack.c.bf16 %v375, %v374
      %v388 = vpack.c.bf16 %v377, %v376
      %v389 = vpack.c.bf16 %v379, %v378
      %v390 = vpack.c.bf16 %v381, %v380
      %v391 = vpack.c.bf16 %v383, %v382
      %v392 = vld [vmem:[#allocation8] sm:$0xf]
      %v393 = vld [vmem:[#allocation8 + $0x4] sm:$0xf]
      %v394 = vld [vmem:[#allocation8 + $0x8] sm:$0xf]
      %v395 = vld [vmem:[#allocation8 + $0xc] sm:$0xf]
      %v396 = vld [vmem:[#allocation8 + $0x10] sm:$0xf]
      %v397 = vld [vmem:[#allocation8 + $0x14] sm:$0xf]
      %v398 = vld [vmem:[#allocation8 + $0x18] sm:$0xf]
      %v399 = vld [vmem:[#allocation8 + $0x1c] sm:$0xf]
      %v400 = vld [vmem:[#allocation8 + $0x20] sm:$0xf]
      %v401 = vld [vmem:[#allocation8 + $0x24] sm:$0xf]
      %v402 = vld [vmem:[#allocation8 + $0x28] sm:$0xf]
      %v403 = vld [vmem:[#allocation8 + $0x2c] sm:$0xf]
      %v404 = vld [vmem:[#allocation8 + $0x30] sm:$0xf]
      %v405 = vld [vmem:[#allocation8 + $0x34] sm:$0xf]
      %v406 = vld [vmem:[#allocation8 + $0x38] sm:$0xf]
      %v407 = vld [vmem:[#allocation8 + $0x3c] sm:$0xf]
      %v408 = vld [vmem:[#allocation9] sm:$0x1]
      %v410 = vlaneseq
      %v411 = vshrl.u32 %v410, 7
      %v412 = vsub.s32 0, %v411
      %v413 = vrot.slane %v408, %v412
      %v431 = vunpack.c.l.b16 %v392
      %v432 = vunpack.c.l.b16 %v393
      %v433 = vunpack.c.l.b16 %v394
      %v434 = vunpack.c.l.b16 %v395
      %v435 = vunpack.c.l.b16 %v396
      %v436 = vunpack.c.l.b16 %v397
      %v437 = vunpack.c.l.b16 %v398
      %v438 = vunpack.c.l.b16 %v399
      %v439 = vunpack.c.l.b16 %v400
      %v440 = vunpack.c.l.b16 %v401
      %v441 = vunpack.c.l.b16 %v402
      %v442 = vunpack.c.l.b16 %v403
      %v443 = vunpack.c.l.b16 %v404
      %v444 = vunpack.c.l.b16 %v405
      %v445 = vunpack.c.l.b16 %v406
      %v446 = vunpack.c.l.b16 %v407
      %v447 = vpack.c.b16 %v432, %v431
      %v448 = vpack.c.b16 %v434, %v433
      %v449 = vpack.c.b16 %v436, %v435
      %v450 = vpack.c.b16 %v438, %v437
      %v451 = vpack.c.b16 %v440, %v439
      %v452 = vpack.c.b16 %v442, %v441
      %v453 = vpack.c.b16 %v444, %v443
      %v454 = vpack.c.b16 %v446, %v445
      %463 = vmatprep.subr.bf16.mxu0 0
      %464 = vmatpush1.bf16.msra.mxu0 %v447
      %465 = vmatprep.subr.bf16.mxu0 0
      %466 = vmatpush1.bf16.msra.mxu0 %v448
      %467 = vmatprep.subr.bf16.mxu0 0
      %468 = vmatpush1.bf16.msra.mxu0 %v449
      %469 = vmatprep.subr.bf16.mxu0 0
      %470 = vmatpush1.bf16.msra.mxu0 %v450
      %471 = vmatprep.subr.bf16.mxu0 0
      %472 = vmatpush1.bf16.msra.mxu0 %v451
      %473 = vmatprep.subr.bf16.mxu0 0
      %474 = vmatpush1.bf16.msra.mxu0 %v452
      %475 = vmatprep.subr.bf16.mxu0 0
      %476 = vmatpush1.bf16.msra.mxu0 %v453
      %477 = vmatprep.subr.bf16.mxu0 0
      %478 = vmatpush1.bf16.msra.mxu0 %v454
      %479 = vmatprep.subr.bf16.mxu0 0
      %480 = vmatpush1.bf16.msra.mxu0 0
      %481 = vmatprep.subr.bf16.mxu0 0
      %482 = vmatpush1.bf16.msra.mxu0 0
      %483 = vmatprep.subr.bf16.mxu0 0
      %484 = vmatpush1.bf16.msra.mxu0 0
      %485 = vmatprep.subr.bf16.mxu0 0
      %486 = vmatpush1.bf16.msra.mxu0 0
      %487 = vmatprep.subr.bf16.mxu0 0
      %488 = vmatpush1.bf16.msra.mxu0 0
      %489 = vmatprep.subr.bf16.mxu0 0
      %490 = vmatpush1.bf16.msra.mxu0 0
      %491 = vmatprep.subr.bf16.mxu0 0
      %492 = vmatpush1.bf16.msra.mxu0 0
      %493 = vmatprep.subr.bf16.mxu0 0
      %494 = vmatpush1.bf16.msra.mxu0 0
      %495 = vmatprep.mubr.bf16.mxu0 0
      %496 = vmatmul.mubr.bf16.gmra.mrb[0].mxu0 %v384
      %v497 = vpop.f32.mrb[0].mxu0
      %v498 = vadd.f32 %v413, %v497
      %v499 = vpop.f32.mrb[0].mxu0
      %v500 = vpop.f32.mrb[0].mxu0
      %v501 = vadd.f32 %v413, %v500
      %v502 = vpop.f32.mrb[0].mxu0
      %503 = vmatprep.mubr.bf16.mxu0 0
      %504 = vmatmul.mubr.bf16.gmra.mrb[0].mxu0 %v385
      %v505 = vpop.f32.mrb[0].mxu0
      %v506 = vadd.f32 %v413, %v505
      %v507 = vpop.f32.mrb[0].mxu0
      %v508 = vpop.f32.mrb[0].mxu0
      %v509 = vadd.f32 %v413, %v508
      %v510 = vpop.f32.mrb[0].mxu0
      %511 = vmatprep.mubr.bf16.mxu0 0
      %512 = vmatmul.mubr.bf16.gmra.mrb[0].mxu0 %v386
      %v513 = vpop.f32.mrb[0].mxu0
      %v514 = vadd.f32 %v413, %v513
      %v515 = vpop.f32.mrb[0].mxu0
      %v516 = vpop.f32.mrb[0].mxu0
      %v517 = vadd.f32 %v413, %v516
      %v518 = vpop.f32.mrb[0].mxu0
      %519 = vmatprep.mubr.bf16.mxu0 0
      %520 = vmatmul.mubr.bf16.gmra.mrb[0].mxu0 %v387
      %v521 = vpop.f32.mrb[0].mxu0
      %v522 = vadd.f32 %v413, %v521
      %v523 = vpop.f32.mrb[0].mxu0
      %v524 = vpop.f32.mrb[0].mxu0
      %v525 = vadd.f32 %v413, %v524
      %v526 = vpop.f32.mrb[0].mxu0
      %527 = vmatprep.mubr.bf16.mxu0 0
      %528 = vmatmul.mubr.bf16.gmra.mrb[0].mxu0 %v388
      %v529 = vpop.f32.mrb[0].mxu0
      %v530 = vadd.f32 %v413, %v529
      %v531 = vpop.f32.mrb[0].mxu0
      %v532 = vpop.f32.mrb[0].mxu0
      %v533 = vadd.f32 %v413, %v532
      %v534 = vpop.f32.mrb[0].mxu0
      %535 = vmatprep.mubr.bf16.mxu0 0
      %536 = vmatmul.mubr.bf16.gmra.mrb[0].mxu0 %v389
      %v537 = vpop.f32.mrb[0].mxu0
      %v538 = vadd.f32 %v413, %v537
      %v539 = vpop.f32.mrb[0].mxu0
      %v540 = vpop.f32.mrb[0].mxu0
      %v541 = vadd.f32 %v413, %v540
      %v542 = vpop.f32.mrb[0].mxu0
      %543 = vmatprep.mubr.bf16.mxu0 0
      %544 = vmatmul.mubr.bf16.gmra.mrb[0].mxu0 %v390
      %v545 = vpop.f32.mrb[0].mxu0
      %v546 = vadd.f32 %v413, %v545
      %v547 = vpop.f32.mrb[0].mxu0
      %v548 = vpop.f32.mrb[0].mxu0
      %v549 = vadd.f32 %v413, %v548
      %v550 = vpop.f32.mrb[0].mxu0
      %551 = vmatprep.mubr.bf16.mxu0 0
      %552 = vmatmul.mubr.bf16.gmra.mrb[0].mxu0 %v391
      %v553 = vpop.f32.mrb[0].mxu0
      %v554 = vadd.f32 %v413, %v553
      %v555 = vpop.f32.mrb[0].mxu0
      %v556 = vpop.f32.mrb[0].mxu0
      %v557 = vadd.f32 %v413, %v556
      %v558 = vpop.f32.mrb[0].mxu0
      %559 = vdwg.mxu0
      %560 = vst [vmem:[#allocation11] sm:$0xff] %v498
      %561 = vst [vmem:[#allocation11 + $0x8] sm:$0xff] %v501
      %562 = vst [vmem:[#allocation11 + $0x10] sm:$0xff] %v506
      %563 = vst [vmem:[#allocation11 + $0x18] sm:$0xff] %v509
      %564 = vst [vmem:[#allocation11 + $0x20] sm:$0xff] %v514
      %565 = vst [vmem:[#allocation11 + $0x28] sm:$0xff] %v517
      %566 = vst [vmem:[#allocation11 + $0x30] sm:$0xff] %v522
      %567 = vst [vmem:[#allocation11 + $0x38] sm:$0xff] %v525
      %568 = vst [vmem:[#allocation11 + $0x40] sm:$0xff] %v530
      %569 = vst [vmem:[#allocation11 + $0x48] sm:$0xff] %v533
      %570 = vst [vmem:[#allocation11 + $0x50] sm:$0xff] %v538
      %571 = vst [vmem:[#allocation11 + $0x58] sm:$0xff] %v541
      %572 = vst [vmem:[#allocation11 + $0x60] sm:$0xff] %v546
      %573 = vst [vmem:[#allocation11 + $0x68] sm:$0xff] %v549
      %574 = vst [vmem:[#allocation11 + $0x70] sm:$0xff] %v554
      %575 = vst [vmem:[#allocation11 + $0x78] sm:$0xff] %v557
    $region41: #{tpu_custom_call.1} parent=1 // pred_fallthru
      _
    // Predicated region
    $region42: #{tpu_custom_call.1} parent=1 // pred_check
      _
    $region43: #{tpu_custom_call.1} parent=1 // pred_check_branch
      %577 = sbr.rel (0) target = $region45
    $region44: #{tpu_custom_call.1} parent=1 // pred_region
      %s579 = ssub.s32 2048, 2048
      %580 = vsyncadd [#allocation5], %s579
      %s581 = sshll.u32 [#allocation11], 4
      %s582 = int_to_ptr.vmem [resolvable:$true] %s581
      %587 = dma.vmem_to_hbm [thread:$0]  %s582, 2048, %s4, [#allocation5], 128, 128, 8
    $region45: #{tpu_custom_call.1} parent=1 // pred_fallthru
      _
    // Predicated region
    $region46: #{tpu_custom_call.1} parent=1 // pred_check
      _
    $region47: #{tpu_custom_call.1} parent=1 // pred_check_branch
      %589 = sbr.rel (0) target = $region49
    $region48: #{tpu_custom_call.1} parent=1 // pred_region
      %590 = dma.done [#allocation5], 2048
    $region49: #{tpu_custom_call.1} parent=1 // pred_fallthru
      _
    %591 = vsyncpa [#allocation4], 1
    %592 = vsyncpa [#allocation7], 1
    %593 = vsyncpa [#allocation10], 1
    %594 = vsyncpa [#allocation5], 1

</llo_original>
